<compile_context>
chip_gen: v7x
topology: tpu7x:2x2x1
jax: 0.10.0
libtpu: 0.0.40
codegen_flags: <defaults>
</compile_context>

<pallas_src>
import functools

import jax
import jax.numpy as jnp
from jax.experimental import pallas as pl
from jax.experimental.pallas import tpu as pltpu


# ---------------------------------------------------------------------------
# Fused Pallas kernel
# ---------------------------------------------------------------------------
def _res_sizes_fused_kernel(x_ref, w_ref, b_ref, o_ref, *,
                            up, fold, down, last, n_seg, seg_len):
    """Whole ResSizes forward for one packed batch group, entirely in VMEM.

    w_ref: bf16 weight slab (rows = layers stacked, 16-aligned row offsets).
    b_ref: f32 bias slab, one column per layer, (c_out, 1) slices.
    up/fold/down/last: static slice descriptors (Python ints).
    n_seg batch elements are packed along the lane axis, seg_len lanes each.
    """
    def w_at(off, c_out, c_in):
        return w_ref[off:off + c_out, :c_in]                 # bf16 (c_out, c_in)

    def b_at(col, c_out):
        return b_ref[:c_out, col:col + 1]                    # f32  (c_out, 1)

    def layer(h_b16, spec, act):
        off, c_out, c_in, col = spec
        y = jnp.dot(w_at(off, c_out, c_in), h_b16,
                    preferred_element_type=jnp.float32)      # MXU, f32 accumulate
        y = y + b_at(col, c_out)                             # f32 epilogue
        if act == "relu":
            return jnp.maximum(y, 0.0)
        return jnp.tanh(y)

    # ---- conv1 + up stack ---------------------------------------------------
    x = x_ref[0].astype(jnp.bfloat16)                        # (c_in_pad, L)
    h32 = layer(x, up[0], "relu")                            # conv1, f32
    pointfeat = h32.astype(jnp.bfloat16)                     # bf16 once; MXU RHS only
    h_b16 = pointfeat
    for spec in up[1:]:                                      # convsup
        h32 = layer(h_b16, spec, "relu")
        h_b16 = h32.astype(jnp.bfloat16)

    # ---- softmax-weighted pool + first down conv (concat & g folded) --------
    #   W0 @ [g_bcast ; pointfeat] == (W_g @ g) folded into the bias
    #                                 + W_pf @ pointfeat
    # The pool reduces per 128-lane batch segment (static lane-aligned slices);
    # stats stay in f32.  g never leaves VMEM and is never lane-broadcast.
    wg_off, c_glob, wpf_off, c_pf, c_out0, col0 = fold
    wg = w_at(wg_off, c_out0, c_glob)
    wpf = w_at(wpf_off, c_out0, c_pf)
    y = jnp.dot(wpf, pointfeat, preferred_element_type=jnp.float32)   # (c_out0, L)
    b0 = b_at(col0, c_out0)

    segs = []
    for s in range(n_seg):                                   # static, tiny
        lo, hi = s * seg_len, (s + 1) * seg_len
        hs = h32[:, lo:hi]                                   # f32 (c_glob, N)
        m = jnp.max(hs, axis=-1, keepdims=True)
        e = jnp.exp(hs - m)
        g_s = (jnp.sum(e * hs, axis=-1, keepdims=True)
               / jnp.sum(e, axis=-1, keepdims=True))         # (c_glob, 1)
        bias_s = jnp.dot(wg, g_s.astype(jnp.bfloat16),
                         preferred_element_type=jnp.float32) + b0     # (c_out0, 1)
        segs.append(jnp.maximum(y[:, lo:hi] + bias_s, 0.0))
    h32 = segs[0] if n_seg == 1 else jnp.concatenate(segs, axis=-1)
    h_b16 = h32.astype(jnp.bfloat16)

    # ---- remaining down convs + last (tanh) ----------------------------------
    for spec in down:                                        # convsdown[1:]
        h32 = layer(h_b16, spec, "relu")
        h_b16 = h32.astype(jnp.bfloat16)
    out = layer(h_b16, last, "tanh")                         # (3, L) f32
    o_ref[0] = out.astype(o_ref.dtype)


# ---------------------------------------------------------------------------
# Parameter construction (deterministic, synthetic) + BatchNorm folding
# ---------------------------------------------------------------------------
def _fold_bn(w, b, gamma, beta, mean, var, eps=1e-5):
    scale = gamma / jnp.sqrt(var + eps)
    w_f = w * scale[:, None]
    b_f = (b - mean) * scale + beta
    return w_f.astype(jnp.float32), b_f.reshape(-1, 1).astype(jnp.float32)


def _make_bn_conv(key, c_in, c_out):
    ks = jax.random.split(key, 6)
    w = jax.random.normal(ks[0], (c_out, c_in), jnp.float32) * (1.0 / jnp.sqrt(c_in))
    b = jax.random.normal(ks[1], (c_out,), jnp.float32) * 0.05
    gamma = jax.random.uniform(ks[2], (c_out,), jnp.float32, 0.5, 1.5)
    beta = jax.random.normal(ks[3], (c_out,), jnp.float32) * 0.1
    mean = jax.random.normal(ks[4], (c_out,), jnp.float32) * 0.1
    var = jax.random.uniform(ks[5], (c_out,), jnp.float32, 0.5, 1.5)
    return _fold_bn(w, b, gamma, beta, mean, var)


def make_params(key, sizesup, sizesdown):
    keys = iter(jax.random.split(key, 64))
    params = {}
    params["conv1"] = _make_bn_conv(next(keys), 4, sizesup[0])
    params["convsup"] = [
        _make_bn_conv(next(keys), sizesup[i], sizesup[i + 1])
        for i in range(len(sizesup) - 1)
    ]
    params["convsdown"] = [
        _make_bn_conv(
            next(keys),
            sizesdown[i] + (0 if i != 0 else sizesup[0]),
            sizesdown[i + 1],
        )
        for i in range(len(sizesdown) - 1)
    ]
    params["last"] = _make_bn_conv(next(keys), sizesdown[-1], 3)
    return params


def _prep_fused_params(params, *, row_align=16):
    """Coalesce all weights into one bf16 slab and all biases into one f32
    slab (2 operand DMAs instead of ~11) plus static slice metadata."""
    w1, b1 = params["conv1"]
    ups = params["convsup"]
    downs = params["convsdown"]
    wl, bl = params["last"]

    c_pf = int(w1.shape[0])                              # pointfeat channels
    c_glob = int(ups[-1][0].shape[0]) if ups else c_pf   # pooled-feature channels
    w0, b0 = downs[0]
    # Concat-fold split assumes the [global ; pointfeat] channel order and the
    # module invariant sizesdown[0] == up-stack output channels.
    assert int(w0.shape[1]) == c_glob + c_pf, (w0.shape, c_glob, c_pf)

    # conv1: zero-pad K (4 -> 8) so the first MXU operand is not sub-sublane.
    c_in_pad = -(-int(w1.shape[1]) // 8) * 8
    w1p = jnp.pad(w1, ((0, 0), (0, c_in_pad - w1.shape[1])))

    # Kernel traversal order; w_g / w_pf share convsdown[0]'s bias.
    weights = ([w1p] + [w for w, _ in ups]
               + [w0[:, :c_glob], w0[:, c_glob:]]
               + [w for w, _ in downs[1:]] + [wl])
    biases = [b1] + [b for _, b in ups] + [b0] + [b for _, b in downs[1:]] + [bl]

    k_max = max(int(w.shape[1]) for w in weights)
    offs, blocks, rows = [], [], 0
    for w in weights:
        offs.append(rows)
        r = -(-int(w.shape[0]) // row_align) * row_align   # 16-aligned offsets (bf16)
        blocks.append(jnp.pad(w, ((0, r - w.shape[0]), (0, k_max - w.shape[1]))))
        rows += r
    w_slab = jnp.concatenate(blocks, axis=0).astype(jnp.bfloat16)   # (rows, k_max)

    c_max = -(-max(int(b.shape[0]) for b in biases) // 8) * 8
    b_slab = jnp.concatenate(
        [jnp.pad(b.reshape(-1, 1), ((0, c_max - b.shape[0]), (0, 0)))
         for b in biases], axis=1).astype(jnp.float32)              # (c_max, n_b)

    # Static slice descriptors: (w_row_offset, c_out, c_in, bias_column).
    n_up = len(ups)
    up_meta = [(offs[0], int(w1.shape[0]), c_in_pad, 0)]
    up_meta += [(offs[1 + i], int(w.shape[0]), int(w.shape[1]), 1 + i)
                for i, (w, _) in enumerate(ups)]
    i_g, i_pf = 1 + n_up, 2 + n_up
    fold_meta = (offs[i_g], c_glob, offs[i_pf], c_pf, int(w0.shape[0]), 1 + n_up)
    down_meta = [(offs[i_pf + 1 + j], int(w.shape[0]), int(w.shape[1]), 2 + n_up + j)
                 for j, (w, _) in enumerate(downs[1:])]
    i_last = i_pf + len(downs)
    last_meta = (offs[i_last], int(wl.shape[0]), int(wl.shape[1]),
                 2 + n_up + len(downs) - 1)

    meta = dict(up=tuple(up_meta), fold=fold_meta,
                down=tuple(down_meta), last=last_meta)
    return w_slab, b_slab, meta, c_in_pad


# ---------------------------------------------------------------------------
# Forward passes
# ---------------------------------------------------------------------------
def res_sizes_forward(x, params, *, batch_lanes=2):
    B, C_in, N = x.shape
    w_slab, b_slab, meta, c_in_pad = _prep_fused_params(params)

    # Pack `bpg` batch elements into the lane axis: each MXU pass sees bpg*N
    # lanes (256 at N=128 fills the v6e/v7x MXU) and the grid shrinks to
    # B//bpg steps.  Falls back to bpg=1 if B is not divisible.
    bpg = batch_lanes if (batch_lanes > 0 and B % batch_lanes == 0) else 1
    n_groups = B // bpg
    L = bpg * N

    if C_in != c_in_pad:
        x = jnp.pad(x, ((0, 0), (0, c_in_pad - C_in), (0, 0)))
    xp = (x.reshape(n_groups, bpg, c_in_pad, N)
           .transpose(0, 2, 1, 3)
           .reshape(n_groups, c_in_pad, L))

    kernel = functools.partial(_res_sizes_fused_kernel,
                               n_seg=bpg, seg_len=N, **meta)

    # Advisory cost hint for XLA scheduling around the custom call.
    mm = (params["conv1"][0].shape[0] * params["conv1"][0].shape[1]
          + sum(w.shape[0] * w.shape[1] for w, _ in params["convsup"])
          + sum(w.shape[0] * w.shape[1] for w, _ in params["convsdown"])
          + params["last"][0].shape[0] * params["last"][0].shape[1])
    c_glob = (params["convsup"][-1][0].shape[0] if params["convsup"]
              else params["conv1"][0].shape[0])
    cost = pl.CostEstimate(
        flops=2 * int(mm) * B * N,
        transcendentals=(int(c_glob) + 3) * B * N,
        bytes_accessed=int(n_groups * c_in_pad * L * 4
                           + w_slab.size * 2 + b_slab.size * 4
                           + B * 3 * N * 4),
    )

    out = pl.pallas_call(
        kernel,
        out_shape=jax.ShapeDtypeStruct((n_groups, 3, L), jnp.float32),
        grid_spec=pltpu.PrefetchScalarGridSpec(
            num_scalar_prefetch=0,
            grid=(n_groups,),
            in_specs=[
                pl.BlockSpec((1, c_in_pad, L), lambda g: (g, 0, 0)),
                # Slabs: full-array blocks, constant index map -> VMEM-resident.
                pl.BlockSpec(w_slab.shape, lambda g: (0, 0)),
                pl.BlockSpec(b_slab.shape, lambda g: (0, 0)),
            ],
            out_specs=pl.BlockSpec((1, 3, L), lambda g: (g, 0, 0)),
        ),
        compiler_params=pltpu.CompilerParams(
            dimension_semantics=("parallel",),
            vmem_limit_bytes=32 * 1024 * 1024),
        cost_estimate=cost,
    )(xp, w_slab, b_slab)

    # Unpack lanes back to (B, 3, N).
    return (out.reshape(n_groups, 3, bpg, N)
               .transpose(0, 2, 1, 3)
               .reshape(B, 3, N))


def res_sizes_ref(x, params):
    """Pure-JAX reference following the original module structure.

    Mirrors the kernel's bf16-matmul / f32-accumulate policy so the check is
    tight; the structural transforms (batch lane-packing, fused pool, concat /
    g bias fold, slab packing) are NOT mirrored, so they are validated too.
    """
    def conv(x, w, b, act):
        y = jnp.einsum("oc,bcn->bon",
                       w.astype(jnp.bfloat16), x.astype(jnp.bfloat16),
                       preferred_element_type=jnp.float32) + b[None]
        if act == "relu":
            return jnp.maximum(y, 0.0)
        if act == "tanh":
            return jnp.tanh(y)
        return y

    x = conv(x, *params["conv1"], act="relu")
    pointfeat = x
    for w, b in params["convsup"]:
        x = conv(x, w, b, act="relu")
    sm = jax.nn.softmax(x, axis=2)
    g = jnp.sum(sm * x, axis=2, keepdims=True)
    g = jnp.broadcast_to(g, x.shape)
    x = jnp.concatenate([g, pointfeat], axis=1)
    for w, b in params["convsdown"]:
        x = conv(x, w, b, act="relu")
    x = conv(x, *params["last"], act="tanh")
    return x


# ---------------------------------------------------------------------------
if __name__ == "__main__":
    sizesup = [32, 64]
    sizesdown = [64, 32]          # sizesdown[0] must equal sizesup[-1]
    B, C_in, N = 2, 4, 128

    key = jax.random.PRNGKey(0)
    k_x, k_p = jax.random.split(key)
    x = jax.random.normal(k_x, (B, C_in, N), jnp.float32)
    params = make_params(k_p, sizesup, sizesdown)

    fwd = jax.jit(res_sizes_forward)
    out = fwd(x, params)
    out = jax.block_until_ready(out)

    ref = res_sizes_ref(x, params)
    assert out.shape == (B, 3, N), out.shape
    err = float(jnp.max(jnp.abs(out - ref)))
    # Tolerance covers accumulation-order differences of the bf16/f32 MXU path
    # (both sides use identical bf16-rounded weights/activations).
    assert err < 2e-2, err

    print("KERNEL_OK")
</pallas_src>

<mosaic_0001>
module attributes {stable_mosaic.version = 11 : i64} {
  func.func @_res_sizes_fused_kernel(%arg0: i32, %arg1: memref<1x8x256xf32, #tpu.memory_space<vmem>>, %arg2: memref<176x64xbf16, #tpu.memory_space<vmem>>, %arg3: memref<64x4xf32, #tpu.memory_space<vmem>>, %arg4: memref<1x3x256xf32, #tpu.memory_space<vmem>>) attributes {dimension_semantics = [#tpu.dimension_semantics<parallel>], iteration_bounds = array<i64: 1>, scalar_prefetch = 0 : i64, scratch_operands = 0 : i64, tpu.core_type = #tpu.core_type<tc>, window_params = [{transform_indices = @transform_0, window_bounds = array<i64: 1, 8, 256>}, {pipeline_mode = #tpu.pipeline_mode<synchronous>, transform_indices = @transform_1, window_bounds = array<i64: 176, 64>}, {pipeline_mode = #tpu.pipeline_mode<synchronous>, transform_indices = @transform_2, window_bounds = array<i64: 64, 4>}, {transform_indices = @transform_3, window_bounds = array<i64: 1, 3, 256>}]} {
    %c0 = arith.constant 0 : index
    %c0_0 = arith.constant 0 : index
    %c0_1 = arith.constant 0 : index
    %0 = vector.load %arg1[%c0, %c0_0, %c0_1] : memref<1x8x256xf32, #tpu.memory_space<vmem>>, vector<1x8x256xf32>
    %1 = vector.shape_cast %0 : vector<1x8x256xf32> to vector<8x256xf32>
    %2 = arith.truncf %1 : vector<8x256xf32> to vector<8x256xbf16>
    %c0_2 = arith.constant 0 : index
    %c0_3 = arith.constant 0 : index
    %3 = vector.load %arg2[%c0_2, %c0_3] : memref<176x64xbf16, #tpu.memory_space<vmem>>, vector<32x8xbf16>
    %cst = arith.constant dense<0.000000e+00> : vector<32x256xf32>
    %4 = tpu.matmul %3, %2, %cst {dimension_numbers = #tpu.dot_dimension_numbers<[1], [0], [0], [1], [0, 0, 1, 1], [], []>} : vector<32x8xbf16>, vector<8x256xbf16>, vector<32x256xf32> -> vector<32x256xf32>
    %c0_4 = arith.constant 0 : index
    %c0_5 = arith.constant 0 : index
    %5 = vector.load %arg3[%c0_4, %c0_5] : memref<64x4xf32, #tpu.memory_space<vmem>>, vector<32x1xf32>
    %6 = vector.broadcast %5 : vector<32x1xf32> to vector<32x256xf32>
    %7 = arith.addf %4, %6 : vector<32x256xf32>
    %cst_6 = arith.constant 0.000000e+00 : f32
    %8 = vector.broadcast %cst_6 : f32 to vector<32x256xf32>
    %9 = arith.maximumf %7, %8 : vector<32x256xf32>
    %10 = arith.truncf %9 : vector<32x256xf32> to vector<32x256xbf16>
    %c32 = arith.constant 32 : index
    %c0_7 = arith.constant 0 : index
    %11 = vector.load %arg2[%c32, %c0_7] : memref<176x64xbf16, #tpu.memory_space<vmem>>, vector<64x32xbf16>
    %cst_8 = arith.constant dense<0.000000e+00> : vector<64x256xf32>
    %12 = tpu.matmul %11, %10, %cst_8 {dimension_numbers = #tpu.dot_dimension_numbers<[1], [0], [0], [1], [0, 0, 1, 1], [], []>} : vector<64x32xbf16>, vector<32x256xbf16>, vector<64x256xf32> -> vector<64x256xf32>
    %c0_9 = arith.constant 0 : index
    %c1 = arith.constant 1 : index
    %13 = vector.load %arg3[%c0_9, %c1] : memref<64x4xf32, #tpu.memory_space<vmem>>, vector<64x1xf32>
    %14 = vector.broadcast %13 : vector<64x1xf32> to vector<64x256xf32>
    %15 = arith.addf %12, %14 : vector<64x256xf32>
    %cst_10 = arith.constant 0.000000e+00 : f32
    %16 = vector.broadcast %cst_10 : f32 to vector<64x256xf32>
    %17 = arith.maximumf %15, %16 : vector<64x256xf32>
    %c96 = arith.constant 96 : index
    %c0_11 = arith.constant 0 : index
    %18 = vector.load %arg2[%c96, %c0_11] : memref<176x64xbf16, #tpu.memory_space<vmem>>, vector<32x64xbf16>
    %c128 = arith.constant 128 : index
    %c0_12 = arith.constant 0 : index
    %19 = vector.load %arg2[%c128, %c0_12] : memref<176x64xbf16, #tpu.memory_space<vmem>>, vector<32x32xbf16>
    %cst_13 = arith.constant dense<0.000000e+00> : vector<32x256xf32>
    %20 = tpu.matmul %19, %10, %cst_13 {dimension_numbers = #tpu.dot_dimension_numbers<[1], [0], [0], [1], [0, 0, 1, 1], [], []>} : vector<32x32xbf16>, vector<32x256xbf16>, vector<32x256xf32> -> vector<32x256xf32>
    %c0_14 = arith.constant 0 : index
    %c2 = arith.constant 2 : index
    %21 = vector.load %arg3[%c0_14, %c2] : memref<64x4xf32, #tpu.memory_space<vmem>>, vector<32x1xf32>
    %22 = vector.extract_strided_slice %17 {offsets = [0, 0], sizes = [64, 128], strides = [1, 1]} : vector<64x256xf32> to vector<64x128xf32>
    %cst_15 = arith.constant dense<0xFF800000> : vector<64xf32>
    %23 = vector.multi_reduction <maximumf>, %22, %cst_15 [1] : vector<64x128xf32> to vector<64xf32>
    %24 = vector.shape_cast %23 : vector<64xf32> to vector<64x1xf32>
    %25 = vector.broadcast %24 : vector<64x1xf32> to vector<64x128xf32>
    %26 = arith.subf %22, %25 : vector<64x128xf32>
    %27 = math.exp %26 : vector<64x128xf32>
    %28 = arith.mulf %27, %22 : vector<64x128xf32>
    %cst_16 = arith.constant dense<0.000000e+00> : vector<64xf32>
    %29 = vector.multi_reduction <add>, %28, %cst_16 [1] : vector<64x128xf32> to vector<64xf32>
    %30 = vector.shape_cast %29 : vector<64xf32> to vector<64x1xf32>
    %cst_17 = arith.constant dense<0.000000e+00> : vector<64xf32>
    %31 = vector.multi_reduction <add>, %27, %cst_17 [1] : vector<64x128xf32> to vector<64xf32>
    %32 = vector.shape_cast %31 : vector<64xf32> to vector<64x1xf32>
    %33 = arith.divf %30, %32 : vector<64x1xf32>
    %34 = arith.truncf %33 : vector<64x1xf32> to vector<64x1xbf16>
    %cst_18 = arith.constant dense<0.000000e+00> : vector<32x1xf32>
    %35 = tpu.matmul %18, %34, %cst_18 {dimension_numbers = #tpu.dot_dimension_numbers<[1], [0], [0], [1], [0, 0, 1, 1], [], []>} : vector<32x64xbf16>, vector<64x1xbf16>, vector<32x1xf32> -> vector<32x1xf32>
    %36 = arith.addf %35, %21 : vector<32x1xf32>
    %37 = vector.extract_strided_slice %20 {offsets = [0, 0], sizes = [32, 128], strides = [1, 1]} : vector<32x256xf32> to vector<32x128xf32>
    %38 = vector.broadcast %36 : vector<32x1xf32> to vector<32x128xf32>
    %39 = arith.addf %37, %38 : vector<32x128xf32>
    %cst_19 = arith.constant 0.000000e+00 : f32
    %40 = vector.broadcast %cst_19 : f32 to vector<32x128xf32>
    %41 = arith.maximumf %39, %40 : vector<32x128xf32>
    %42 = vector.extract_strided_slice %17 {offsets = [0, 128], sizes = [64, 128], strides = [1, 1]} : vector<64x256xf32> to vector<64x128xf32>
    %cst_20 = arith.constant dense<0xFF800000> : vector<64xf32>
    %43 = vector.multi_reduction <maximumf>, %42, %cst_20 [1] : vector<64x128xf32> to vector<64xf32>
    %44 = vector.shape_cast %43 : vector<64xf32> to vector<64x1xf32>
    %45 = vector.broadcast %44 : vector<64x1xf32> to vector<64x128xf32>
    %46 = arith.subf %42, %45 : vector<64x128xf32>
    %47 = math.exp %46 : vector<64x128xf32>
    %48 = arith.mulf %47, %42 : vector<64x128xf32>
    %cst_21 = arith.constant dense<0.000000e+00> : vector<64xf32>
    %49 = vector.multi_reduction <add>, %48, %cst_21 [1] : vector<64x128xf32> to vector<64xf32>
    %50 = vector.shape_cast %49 : vector<64xf32> to vector<64x1xf32>
    %cst_22 = arith.constant dense<0.000000e+00> : vector<64xf32>
    %51 = vector.multi_reduction <add>, %47, %cst_22 [1] : vector<64x128xf32> to vector<64xf32>
    %52 = vector.shape_cast %51 : vector<64xf32> to vector<64x1xf32>
    %53 = arith.divf %50, %52 : vector<64x1xf32>
    %54 = arith.truncf %53 : vector<64x1xf32> to vector<64x1xbf16>
    %cst_23 = arith.constant dense<0.000000e+00> : vector<32x1xf32>
    %55 = tpu.matmul %18, %54, %cst_23 {dimension_numbers = #tpu.dot_dimension_numbers<[1], [0], [0], [1], [0, 0, 1, 1], [], []>} : vector<32x64xbf16>, vector<64x1xbf16>, vector<32x1xf32> -> vector<32x1xf32>
    %56 = arith.addf %55, %21 : vector<32x1xf32>
    %57 = vector.extract_strided_slice %20 {offsets = [0, 128], sizes = [32, 128], strides = [1, 1]} : vector<32x256xf32> to vector<32x128xf32>
    %58 = vector.broadcast %56 : vector<32x1xf32> to vector<32x128xf32>
    %59 = arith.addf %57, %58 : vector<32x128xf32>
    %cst_24 = arith.constant 0.000000e+00 : f32
    %60 = vector.broadcast %cst_24 : f32 to vector<32x128xf32>
    %61 = arith.maximumf %59, %60 : vector<32x128xf32>
    %62 = tpu.concatenate %41, %61 in 1 : vector<32x128xf32>, vector<32x128xf32> -> vector<32x256xf32>
    %63 = arith.truncf %62 : vector<32x256xf32> to vector<32x256xbf16>
    %c160 = arith.constant 160 : index
    %c0_25 = arith.constant 0 : index
    %64 = vector.load %arg2[%c160, %c0_25] : memref<176x64xbf16, #tpu.memory_space<vmem>>, vector<3x32xbf16>
    %cst_26 = arith.constant dense<0.000000e+00> : vector<3x256xf32>
    %65 = tpu.matmul %64, %63, %cst_26 {dimension_numbers = #tpu.dot_dimension_numbers<[1], [0], [0], [1], [0, 0, 1, 1], [], []>} : vector<3x32xbf16>, vector<32x256xbf16>, vector<3x256xf32> -> vector<3x256xf32>
    %c0_27 = arith.constant 0 : index
    %c3 = arith.constant 3 : index
    %66 = vector.load %arg3[%c0_27, %c3] : memref<64x4xf32, #tpu.memory_space<vmem>>, vector<3x1xf32>
    %67 = vector.broadcast %66 : vector<3x1xf32> to vector<3x256xf32>
    %68 = arith.addf %65, %67 : vector<3x256xf32>
    %69 = math.tanh %68 : vector<3x256xf32>
    %c0_28 = arith.constant 0 : index
    %c0_29 = arith.constant 0 : index
    %c0_30 = arith.constant 0 : index
    %70 = vector.load %arg4[%c0_28, %c0_29, %c0_30] : memref<1x3x256xf32, #tpu.memory_space<vmem>>, vector<1x3x256xf32>
    %71 = vector.shape_cast %70 : vector<1x3x256xf32> to vector<3x256xf32>
    %72 = vector.shape_cast %69 : vector<3x256xf32> to vector<1x3x256xf32>
    tpu.vector_store %arg4[%c0_28, %c0_29, %c0_30], %72 {strides = array<i32>} : memref<1x3x256xf32, #tpu.memory_space<vmem>>, vector<1x3x256xf32>,
    return
  }
  func.func @transform_0(%arg0: i32) -> (i32, i32, i32) {
    %c0_i32 = arith.constant 0 : i32
    %c0_i32_0 = arith.constant 0 : i32
    %c0_i32_1 = arith.constant 0 : i32
    return %arg0, %c0_i32, %c0_i32_0 : i32, i32, i32
  }
  func.func @transform_1(%arg0: i32) -> (i32, i32) {
    %c0_i32 = arith.constant 0 : i32
    %c0_i32_0 = arith.constant 0 : i32
    %c0_i32_1 = arith.constant 0 : i32
    return %c0_i32, %c0_i32_0 : i32, i32
  }
  func.func @transform_2(%arg0: i32) -> (i32, i32) {
    %c0_i32 = arith.constant 0 : i32
    %c0_i32_0 = arith.constant 0 : i32
    %c0_i32_1 = arith.constant 0 : i32
    return %c0_i32, %c0_i32_0 : i32, i32
  }
  func.func @transform_3(%arg0: i32) -> (i32, i32, i32) {
    %c0_i32 = arith.constant 0 : i32
    %c0_i32_0 = arith.constant 0 : i32
    %c0_i32_1 = arith.constant 0 : i32
    return %arg0, %c0_i32, %c0_i32_0 : i32, i32, i32
  }
}

</mosaic_0001>

<llo_original>
// kernel: res_sizes_forward.1
$region0: #{res_sizes_forward.1}
  #allocation0 [shape = 'u32[]', space=smem, size = 0x4, offset = 0x4, fixed_abs, tag = 'smem constant byte address 0x4 - core index']
  #allocation1 [shape = 'u32[144,128]{1,0:T(1,128)}', space=vmem, size = 0x12000, scoped, tag = 'internal scratch']
  %s0 = inlined_call_operand.vmem [shape: f32[1,8,256], index: 0, kind: input, shape index: {}]
  %s1 = inlined_call_operand.vmem [shape: bf16[176,64], index: 1, kind: input, shape index: {}]
  %s2 = inlined_call_operand.vmem [shape: f32[64,4], index: 2, kind: input, shape index: {}]
  %s3 = inlined_call_operand.vmem [shape: f32[1,3,256], index: 3, kind: output, shape index: {}]
  %s4 = sld [smem:[#allocation0]]
  $region22: #{res_sizes_forward.1} parent=0
    _
  %s6 = ssub.s32 1, %s4
  %s7 = scalar_select 0, %s6, %s4
  // Predicated region
  $region2: #{res_sizes_forward.1} parent=0 // pred_check
    _
  $region3: #{res_sizes_forward.1} parent=0 // pred_check_branch
    %9 = sbr.rel (0) target = $region5
  $region4: #{res_sizes_forward.1} parent=0 // pred_region
    _
  $region5: #{res_sizes_forward.1} parent=0 // pred_fallthru
    _
  // Predicated region
  $region6: #{res_sizes_forward.1} parent=0 // pred_check
    _
  $region7: #{res_sizes_forward.1} parent=0 // pred_check_branch
    %11 = sbr.rel (0) target = $region9
  $region8: #{res_sizes_forward.1} parent=0 // pred_region
    _
  $region9: #{res_sizes_forward.1} parent=0 // pred_fallthru
    _
  // Predicated region
  $region10: #{res_sizes_forward.1} parent=0 // pred_check
    _
  $region11: #{res_sizes_forward.1} parent=0 // pred_check_branch
    %13 = sbr.rel (0) target = $region13
  $region12: #{res_sizes_forward.1} parent=0 // pred_region
    _
  $region13: #{res_sizes_forward.1} parent=0 // pred_fallthru
    _
  %v15 = vld [vmem:[%s0] sm:$0xff]
  %v16 = vld [vmem:[%s0 + $0x8] sm:$0xff]
  %v17 = vpack.c.bf16 %v15, %v15
  %v18 = vpack.c.bf16 %v16, %v16
  %v19 = vld [vmem:[%s1] sm:$0xf]
  %v20 = vld [vmem:[%s1 + $0x4] sm:$0xf]
  %v21 = vld [vmem:[%s1 + $0x8] sm:$0xf]
  %v22 = vld [vmem:[%s1 + $0xc] sm:$0xf]
  %v23 = vld [vmem:[%s2] sm:$0xff]
  %v24 = vld [vmem:[%s2 + $0x8] sm:$0xff]
  %v25 = vld [vmem:[%s2 + $0x10] sm:$0xff]
  %v26 = vld [vmem:[%s2 + $0x18] sm:$0xff]
  %28 = vset.pattern.permute.xlu0 0
  %29 = vperm.xlu0 %28, %v23
  %v30 = vpop.permute.xlu0 %29
  %33 = vset.pattern.permute.xlu0 0
  %34 = vperm.xlu0 %33, %v24
  %v35 = vpop.permute.xlu0 %34
  %38 = vset.pattern.permute.xlu0 0
  %39 = vperm.xlu0 %38, %v25
  %v40 = vpop.permute.xlu0 %39
  %43 = vset.pattern.permute.xlu0 0
  %44 = vperm.xlu0 %43, %v26
  %v45 = vpop.permute.xlu0 %44
  %v51 = vunpack.c.l.b16 %v19
  %v52 = vunpack.c.l.b16 %v20
  %v53 = vunpack.c.l.b16 %v21
  %v54 = vunpack.c.l.b16 %v22
  %v55 = vpack.c.b16 %v52, %v51
  %v56 = vpack.c.b16 %v54, %v53
  %vm57 = vcmask 64512
  %v59 = vsel %vm57, %v55, 0
  %v62 = vsel %vm57, %v56, 0
  %vm64 = vcmask 1043456
  %v66 = vsel %vm64, %v17, 0
  %v69 = vsel %vm64, %v18, 0
  %71 = vmatprep.subr.bf16.mxu0 %v69
  %72 = vmatpush1.bf16.msra.mxu0 %v66
  %73 = vmatprep.subr.bf16.mxu0 0
  %74 = vmatpush1.bf16.msra.mxu0 0
  %75 = vmatprep.subr.bf16.mxu0 0
  %76 = vmatpush1.bf16.msra.mxu0 0
  %77 = vmatprep.subr.bf16.mxu0 0
  %78 = vmatpush1.bf16.msra.mxu0 0
  %79 = vmatprep.subr.bf16.mxu0 0
  %80 = vmatpush1.bf16.msra.mxu0 0
  %81 = vmatprep.subr.bf16.mxu0 0
  %82 = vmatpush1.bf16.msra.mxu0 0
  %83 = vmatprep.subr.bf16.mxu0 0
  %84 = vmatpush1.bf16.msra.mxu0 0
  %85 = vmatprep.subr.bf16.mxu0 0
  %86 = vmatpush1.bf16.msra.mxu0 0
  %87 = vmatprep.subr.bf16.mxu0 0
  %88 = vmatpush1.bf16.msra.mxu0 0
  %89 = vmatprep.subr.bf16.mxu0 0
  %90 = vmatpush1.bf16.msra.mxu0 0
  %91 = vmatprep.subr.bf16.mxu0 0
  %92 = vmatpush1.bf16.msra.mxu0 0
  %93 = vmatprep.subr.bf16.mxu0 0
  %94 = vmatpush1.bf16.msra.mxu0 0
  %95 = vmatprep.subr.bf16.mxu0 0
  %96 = vmatpush1.bf16.msra.mxu0 0
  %97 = vmatprep.subr.bf16.mxu0 0
  %98 = vmatpush1.bf16.msra.mxu0 0
  %99 = vmatprep.subr.bf16.mxu0 0
  %100 = vmatpush1.bf16.msra.mxu0 0
  %101 = vmatprep.subr.bf16.mxu0 0
  %102 = vmatpush1.bf16.msra.mxu0 0
  %103 = vmatprep.mubr.bf16.mxu0 0
  %104 = vmatmul.mubr.bf16.gmra.mrb[0].mxu0 %v59
  %v105 = vpop.f32.mrb[0].mxu0
  %v106 = vadd.f32 %v30, %v105
  %v107 = vpop.f32.mrb[0].mxu0
  %v108 = vadd.f32 %v30, %v107
  %v109 = vpop.f32.mrb[0].mxu0
  %v110 = vadd.f32 %v35, %v109
  %v111 = vpop.f32.mrb[0].mxu0
  %v112 = vadd.f32 %v35, %v111
  %113 = vmatprep.mubr.bf16.mxu0 0
  %114 = vmatmul.mubr.bf16.gmra.mrb[0].mxu0 %v62
  %v115 = vpop.f32.mrb[0].mxu0
  %v116 = vadd.f32 %v40, %v115
  %v117 = vpop.f32.mrb[0].mxu0
  %v118 = vadd.f32 %v40, %v117
  %v119 = vpop.f32.mrb[0].mxu0
  %v120 = vadd.f32 %v45, %v119
  %v121 = vpop.f32.mrb[0].mxu0
  %v122 = vadd.f32 %v45, %v121
  %123 = vdwg.mxu0
  %v124 = vmax.f32 %v106, 0.0
  %v125 = vmax.f32 %v108, 0.0
  %v126 = vmax.f32 %v110, 0.0
  %v127 = vmax.f32 %v112, 0.0
  %v128 = vmax.f32 %v116, 0.0
  %v129 = vmax.f32 %v118, 0.0
  %v130 = vmax.f32 %v120, 0.0
  %v131 = vmax.f32 %v122, 0.0
  %v132 = vpack.c.bf16 %v126, %v124
  %v133 = vpack.c.bf16 %v127, %v125
  %v134 = vpack.c.bf16 %v130, %v128
  %v135 = vpack.c.bf16 %v131, %v129
  %v136 = vld [vmem:[%s1 + $0x10] sm:$0xf]
  %v137 = vld [vmem:[%s1 + $0x14] sm:$0xf]
  %v138 = vld [vmem:[%s1 + $0x18] sm:$0xf]
  %v139 = vld [vmem:[%s1 + $0x1c] sm:$0xf]
  %v140 = vld [vmem:[%s1 + $0x20] sm:$0xf]
  %v141 = vld [vmem:[%s1 + $0x24] sm:$0xf]
  %v142 = vld [vmem:[%s1 + $0x28] sm:$0xf]
  %v143 = vld [vmem:[%s1 + $0x2c] sm:$0xf]
  %v144 = vld [vmem:[%s2] sm:$0xff]
  %v145 = vld [vmem:[%s2 + $0x8] sm:$0xff]
  %v146 = vld [vmem:[%s2 + $0x10] sm:$0xff]
  %v147 = vld [vmem:[%s2 + $0x18] sm:$0xff]
  %v148 = vld [vmem:[%s2 + $0x20] sm:$0xff]
  %v149 = vld [vmem:[%s2 + $0x28] sm:$0xff]
  %v150 = vld [vmem:[%s2 + $0x30] sm:$0xff]
  %v151 = vld [vmem:[%s2 + $0x38] sm:$0xff]
  %153 = vset.pattern.permute.xlu0 1
  %154 = vperm.xlu0 %153, %v144
  %v155 = vpop.permute.xlu0 %154
  %158 = vset.pattern.permute.xlu0 1
  %159 = vperm.xlu0 %158, %v145
  %v160 = vpop.permute.xlu0 %159
  %163 = vset.pattern.permute.xlu0 1
  %164 = vperm.xlu0 %163, %v146
  %v165 = vpop.permute.xlu0 %164
  %168 = vset.pattern.permute.xlu0 1
  %169 = vperm.xlu0 %168, %v147
  %v170 = vpop.permute.xlu0 %169
  %173 = vset.pattern.permute.xlu0 1
  %174 = vperm.xlu0 %173, %v148
  %v175 = vpop.permute.xlu0 %174
  %178 = vset.pattern.permute.xlu0 1
  %179 = vperm.xlu0 %178, %v149
  %v180 = vpop.permute.xlu0 %179
  %183 = vset.pattern.permute.xlu0 1
  %184 = vperm.xlu0 %183, %v150
  %v185 = vpop.permute.xlu0 %184
  %188 = vset.pattern.permute.xlu0 1
  %189 = vperm.xlu0 %188, %v151
  %v190 = vpop.permute.xlu0 %189
  %v200 = vunpack.c.l.b16 %v136
  %v201 = vunpack.c.l.b16 %v137
  %v202 = vunpack.c.l.b16 %v138
  %v203 = vunpack.c.l.b16 %v139
  %v204 = vunpack.c.l.b16 %v140
  %v205 = vunpack.c.l.b16 %v141
  %v206 = vunpack.c.l.b16 %v142
  %v207 = vunpack.c.l.b16 %v143
  %v208 = vpack.c.b16 %v201, %v200
  %v209 = vpack.c.b16 %v203, %v202
  %v210 = vpack.c.b16 %v205, %v204
  %v211 = vpack.c.b16 %v207, %v206
  %vm212 = vcmask 261120
  %v214 = vsel %vm212, %v208, 0
  %v217 = vsel %vm212, %v209, 0
  %v220 = vsel %vm212, %v210, 0
  %v223 = vsel %vm212, %v211, 0
  %225 = vmatprep.subr.bf16.mxu0 %v133
  %226 = vmatpush1.bf16.msra.mxu0 %v132
  %227 = vmatprep.subr.bf16.mxu0 %v135
  %228 = vmatpush1.bf16.msra.mxu0 %v134
  %229 = vmatprep.subr.bf16.mxu0 0
  %230 = vmatpush1.bf16.msra.mxu0 0
  %231 = vmatprep.subr.bf16.mxu0 0
  %232 = vmatpush1.bf16.msra.mxu0 0
  %233 = vmatprep.subr.bf16.mxu0 0
  %234 = vmatpush1.bf16.msra.mxu0 0
  %235 = vmatprep.subr.bf16.mxu0 0
  %236 = vmatpush1.bf16.msra.mxu0 0
  %237 = vmatprep.subr.bf16.mxu0 0
  %238 = vmatpush1.bf16.msra.mxu0 0
  %239 = vmatprep.subr.bf16.mxu0 0
  %240 = vmatpush1.bf16.msra.mxu0 0
  %241 = vmatprep.subr.bf16.mxu0 0
  %242 = vmatpush1.bf16.msra.mxu0 0
  %243 = vmatprep.subr.bf16.mxu0 0
  %244 = vmatpush1.bf16.msra.mxu0 0
  %245 = vmatprep.subr.bf16.mxu0 0
  %246 = vmatpush1.bf16.msra.mxu0 0
  %247 = vmatprep.subr.bf16.mxu0 0
  %248 = vmatpush1.bf16.msra.mxu0 0
  %249 = vmatprep.subr.bf16.mxu0 0
  %250 = vmatpush1.bf16.msra.mxu0 0
  %251 = vmatprep.subr.bf16.mxu0 0
  %252 = vmatpush1.bf16.msra.mxu0 0
  %253 = vmatprep.subr.bf16.mxu0 0
  %254 = vmatpush1.bf16.msra.mxu0 0
  %255 = vmatprep.subr.bf16.mxu0 0
  %256 = vmatpush1.bf16.msra.mxu0 0
  %257 = vmatprep.mubr.bf16.mxu0 0
  %258 = vmatmul.mubr.bf16.gmra.mrb[0].mxu0 %v214
  %v259 = vpop.f32.mrb[0].mxu0
  %v260 = vadd.f32 %v155, %v259
  %v261 = vpop.f32.mrb[0].mxu0
  %v262 = vadd.f32 %v155, %v261
  %v263 = vpop.f32.mrb[0].mxu0
  %v264 = vadd.f32 %v160, %v263
  %v265 = vpop.f32.mrb[0].mxu0
  %v266 = vadd.f32 %v160, %v265
  %267 = vmatprep.mubr.bf16.mxu0 0
  %268 = vmatmul.mubr.bf16.gmra.mrb[0].mxu0 %v217
  %v269 = vpop.f32.mrb[0].mxu0
  %v270 = vadd.f32 %v165, %v269
  %v271 = vpop.f32.mrb[0].mxu0
  %v272 = vadd.f32 %v165, %v271
  %v273 = vpop.f32.mrb[0].mxu0
  %v274 = vadd.f32 %v170, %v273
  %v275 = vpop.f32.mrb[0].mxu0
  %v276 = vadd.f32 %v170, %v275
  %277 = vmatprep.mubr.bf16.mxu0 0
  %278 = vmatmul.mubr.bf16.gmra.mrb[0].mxu0 %v220
  %v279 = vpop.f32.mrb[0].mxu0
  %v280 = vadd.f32 %v175, %v279
  %v281 = vpop.f32.mrb[0].mxu0
  %v282 = vadd.f32 %v175, %v281
  %v283 = vpop.f32.mrb[0].mxu0
  %v284 = vadd.f32 %v180, %v283
  %v285 = vpop.f32.mrb[0].mxu0
  %v286 = vadd.f32 %v180, %v285
  %287 = vmatprep.mubr.bf16.mxu0 0
  %288 = vmatmul.mubr.bf16.gmra.mrb[0].mxu0 %v223
  %v289 = vpop.f32.mrb[0].mxu0
  %v290 = vadd.f32 %v185, %v289
  %v291 = vpop.f32.mrb[0].mxu0
  %v292 = vadd.f32 %v185, %v291
  %v293 = vpop.f32.mrb[0].mxu0
  %v294 = vadd.f32 %v190, %v293
  %v295 = vpop.f32.mrb[0].mxu0
  %v296 = vadd.f32 %v190, %v295
  %297 = vdwg.mxu0
  %v298 = vmax.f32 %v260, 0.0
  %v299 = vmax.f32 %v262, 0.0
  %v300 = vmax.f32 %v264, 0.0
  %v301 = vmax.f32 %v266, 0.0
  %v302 = vmax.f32 %v270, 0.0
  %v303 = vmax.f32 %v272, 0.0
  %v304 = vmax.f32 %v274, 0.0
  %v305 = vmax.f32 %v276, 0.0
  %v306 = vmax.f32 %v280, 0.0
  %v307 = vmax.f32 %v282, 0.0
  %v308 = vmax.f32 %v284, 0.0
  %v309 = vmax.f32 %v286, 0.0
  %v310 = vmax.f32 %v290, 0.0
  %v311 = vmax.f32 %v292, 0.0
  %v312 = vmax.f32 %v294, 0.0
  %v313 = vmax.f32 %v296, 0.0
  %v314 = vld [vmem:[%s1 + $0x30] sm:$0xf]
  %v315 = vld [vmem:[%s1 + $0x34] sm:$0xf]
  %v316 = vld [vmem:[%s1 + $0x38] sm:$0xf]
  %v317 = vld [vmem:[%s1 + $0x3c] sm:$0xf]
  %v318 = vld [vmem:[%s1 + $0x40] sm:$0xf]
  %v319 = vld [vmem:[%s1 + $0x44] sm:$0xf]
  %v320 = vld [vmem:[%s1 + $0x48] sm:$0xf]
  %v321 = vld [vmem:[%s1 + $0x4c] sm:$0xf]
  %v326 = vunpack.c.l.b16 %v318
  %v327 = vunpack.c.l.b16 %v319
  %v328 = vunpack.c.l.b16 %v320
  %v329 = vunpack.c.l.b16 %v321
  %v330 = vpack.c.b16 %v327, %v326
  %v331 = vpack.c.b16 %v329, %v328
  %v333 = vsel %vm212, %v330, 0
  %v336 = vsel %vm212, %v331, 0
  %338 = vmatprep.subr.bf16.mxu0 %v133
  %339 = vmatpush1.bf16.msra.mxu0 %v132
  %340 = vmatprep.subr.bf16.mxu0 %v135
  %341 = vmatpush1.bf16.msra.mxu0 %v134
  %342 = vmatprep.subr.bf16.mxu0 0
  %343 = vmatpush1.bf16.msra.mxu0 0
  %344 = vmatprep.subr.bf16.mxu0 0
  %345 = vmatpush1.bf16.msra.mxu0 0
  %346 = vmatprep.subr.bf16.mxu0 0
  %347 = vmatpush1.bf16.msra.mxu0 0
  %348 = vmatprep.subr.bf16.mxu0 0
  %349 = vmatpush1.bf16.msra.mxu0 0
  %350 = vmatprep.subr.bf16.mxu0 0
  %351 = vmatpush1.bf16.msra.mxu0 0
  %352 = vmatprep.subr.bf16.mxu0 0
  %353 = vmatpush1.bf16.msra.mxu0 0
  %354 = vmatprep.subr.bf16.mxu0 0
  %355 = vmatpush1.bf16.msra.mxu0 0
  %356 = vmatprep.subr.bf16.mxu0 0
  %357 = vmatpush1.bf16.msra.mxu0 0
  %358 = vmatprep.subr.bf16.mxu0 0
  %359 = vmatpush1.bf16.msra.mxu0 0
  %360 = vmatprep.subr.bf16.mxu0 0
  %361 = vmatpush1.bf16.msra.mxu0 0
  %362 = vmatprep.subr.bf16.mxu0 0
  %363 = vmatpush1.bf16.msra.mxu0 0
  %364 = vmatprep.subr.bf16.mxu0 0
  %365 = vmatpush1.bf16.msra.mxu0 0
  %366 = vmatprep.subr.bf16.mxu0 0
  %367 = vmatpush1.bf16.msra.mxu0 0
  %368 = vmatprep.subr.bf16.mxu0 0
  %369 = vmatpush1.bf16.msra.mxu0 0
  %370 = vmatprep.mubr.bf16.mxu0 0
  %371 = vmatmul.mubr.bf16.gmra.mrb[0].mxu0 %v333
  %v372 = vpop.f32.mrb[0].mxu0
  %v373 = vadd.f32 0.0, %v372
  %v374 = vpop.f32.mrb[0].mxu0
  %v375 = vadd.f32 0.0, %v374
  %v376 = vpop.f32.mrb[0].mxu0
  %v377 = vadd.f32 0.0, %v376
  %v378 = vpop.f32.mrb[0].mxu0
  %v379 = vadd.f32 0.0, %v378
  %380 = vmatprep.mubr.bf16.mxu0 0
  %381 = vmatmul.mubr.bf16.gmra.mrb[0].mxu0 %v336
  %v382 = vpop.f32.mrb[0].mxu0
  %v383 = vadd.f32 0.0, %v382
  %v384 = vpop.f32.mrb[0].mxu0
  %v385 = vadd.f32 0.0, %v384
  %v386 = vpop.f32.mrb[0].mxu0
  %v387 = vadd.f32 0.0, %v386
  %v388 = vpop.f32.mrb[0].mxu0
  %v389 = vadd.f32 0.0, %v388
  %390 = vdwg.mxu0
  %391 = vmax.xlane.f32.xlu0 %v298
  %v392 = vpop.xlane.xlu0 %391
  %393 = vmax.xlane.f32.xlu0 %v300
  %v394 = vpop.xlane.xlu0 %393
  %395 = vmax.xlane.f32.xlu0 %v302
  %v396 = vpop.xlane.xlu0 %395
  %397 = vmax.xlane.f32.xlu0 %v304
  %v398 = vpop.xlane.xlu0 %397
  %399 = vmax.xlane.f32.xlu0 %v306
  %v400 = vpop.xlane.xlu0 %399
  %401 = vmax.xlane.f32.xlu0 %v308
  %v402 = vpop.xlane.xlu0 %401
  %403 = vmax.xlane.f32.xlu0 %v310
  %v404 = vpop.xlane.xlu0 %403
  %405 = vmax.xlane.f32.xlu0 %v312
  %v406 = vpop.xlane.xlu0 %405
  %v407 = vsub.f32 %v298, %v392
  %v408 = vsub.f32 %v300, %v394
  %v409 = vsub.f32 %v302, %v396
  %v410 = vsub.f32 %v304, %v398
  %v411 = vsub.f32 %v306, %v400
  %v412 = vsub.f32 %v308, %v402
  %v413 = vsub.f32 %v310, %v404
  %v414 = vsub.f32 %v312, %v406
  %v415 = vmul.f32 %v407, 1.442695
  %v416 = vpow.pop %v415
  %v417 = vmul.f32 %v408, 1.442695
  %v418 = vpow.pop %v417
  %v419 = vmul.f32 %v409, 1.442695
  %v420 = vpow.pop %v419
  %v421 = vmul.f32 %v410, 1.442695
  %v422 = vpow.pop %v421
  %v423 = vmul.f32 %v411, 1.442695
  %v424 = vpow.pop %v423
  %v425 = vmul.f32 %v412, 1.442695
  %v426 = vpow.pop %v425
  %v427 = vmul.f32 %v413, 1.442695
  %v428 = vpow.pop %v427
  %v429 = vmul.f32 %v414, 1.442695
  %v430 = vpow.pop %v429
  %v431 = vmul.f32 %v416, %v298
  %v432 = vmul.f32 %v418, %v300
  %v433 = vmul.f32 %v420, %v302
  %v434 = vmul.f32 %v422, %v304
  %v435 = vmul.f32 %v424, %v306
  %v436 = vmul.f32 %v426, %v308
  %v437 = vmul.f32 %v428, %v310
  %v438 = vmul.f32 %v430, %v312
  %439 = vadd.xlane.f32.xlu0 %v431
  %v440 = vpop.xlane.xlu0 %439
  %441 = vadd.xlane.f32.xlu0 %v432
  %v442 = vpop.xlane.xlu0 %441
  %443 = vadd.xlane.f32.xlu0 %v433
  %v444 = vpop.xlane.xlu0 %443
  %445 = vadd.xlane.f32.xlu0 %v434
  %v446 = vpop.xlane.xlu0 %445
  %447 = vadd.xlane.f32.xlu0 %v435
  %v448 = vpop.xlane.xlu0 %447
  %449 = vadd.xlane.f32.xlu0 %v436
  %v450 = vpop.xlane.xlu0 %449
  %451 = vadd.xlane.f32.xlu0 %v437
  %v452 = vpop.xlane.xlu0 %451
  %453 = vadd.xlane.f32.xlu0 %v438
  %v454 = vpop.xlane.xlu0 %453
  %455 = vadd.xlane.f32.xlu0 %v416
  %v456 = vpop.xlane.xlu0 %455
  %457 = vadd.xlane.f32.xlu0 %v418
  %v458 = vpop.xlane.xlu0 %457
  %459 = vadd.xlane.f32.xlu0 %v420
  %v460 = vpop.xlane.xlu0 %459
  %461 = vadd.xlane.f32.xlu0 %v422
  %v462 = vpop.xlane.xlu0 %461
  %463 = vadd.xlane.f32.xlu0 %v424
  %v464 = vpop.xlane.xlu0 %463
  %465 = vadd.xlane.f32.xlu0 %v426
  %v466 = vpop.xlane.xlu0 %465
  %467 = vadd.xlane.f32.xlu0 %v428
  %v468 = vpop.xlane.xlu0 %467
  %469 = vadd.xlane.f32.xlu0 %v430
  %v470 = vpop.xlane.xlu0 %469
  %v471 = vrcp.pop %v456
  %v472 = vmul.f32 %v440, %v471
  %v473 = vrcp.pop %v458
  %v474 = vmul.f32 %v442, %v473
  %v475 = vrcp.pop %v460
  %v476 = vmul.f32 %v444, %v475
  %v477 = vrcp.pop %v462
  %v478 = vmul.f32 %v446, %v477
  %v479 = vrcp.pop %v464
  %v480 = vmul.f32 %v448, %v479
  %v481 = vrcp.pop %v466
  %v482 = vmul.f32 %v450, %v481
  %v483 = vrcp.pop %v468
  %v484 = vmul.f32 %v452, %v483
  %v485 = vrcp.pop %v470
  %v486 = vmul.f32 %v454, %v485
  %v487 = vpack.c.bf16 %v474, %v472
  %v488 = vpack.c.bf16 %v478, %v476
  %v489 = vpack.c.bf16 %v482, %v480
  %v490 = vpack.c.bf16 %v486, %v484
  %v495 = vunpack.c.l.b16 %v314
  %v496 = vunpack.c.l.b16 %v315
  %v497 = vunpack.c.l.b16 %v316
  %v498 = vunpack.c.l.b16 %v317
  %v499 = vpack.c.b16 %v496, %v495
  %v500 = vpack.c.b16 %v498, %v497
  %501 = vrot.lane.b32.xlu0 %v23, 126
  %v502 = vpop.permute.xlu0 %501
  %503 = vrot.lane.b32.xlu0 %v24, 126
  %v504 = vpop.permute.xlu0 %503
  %505 = vrot.lane.b32.xlu0 %v25, 126
  %v506 = vpop.permute.xlu0 %505
  %507 = vrot.lane.b32.xlu0 %v26, 126
  %v508 = vpop.permute.xlu0 %507
  %vm513 = vcmask 523264
  %v515 = vsel %vm513, %v499, 0
  %v518 = vsel %vm513, %v500, 0
  %520 = vmatprep.subr.bf16.mxu0 0
  %521 = vmatpush1.bf16.msra.mxu0 %v487
  %522 = vmatprep.subr.bf16.mxu0 0
  %523 = vmatpush1.bf16.msra.mxu0 %v488
  %524 = vmatprep.subr.bf16.mxu0 0
  %525 = vmatpush1.bf16.msra.mxu0 %v489
  %526 = vmatprep.subr.bf16.mxu0 0
  %527 = vmatpush1.bf16.msra.mxu0 %v490
  %528 = vmatprep.subr.bf16.mxu0 0
  %529 = vmatpush1.bf16.msra.mxu0 0
  %530 = vmatprep.subr.bf16.mxu0 0
  %531 = vmatpush1.bf16.msra.mxu0 0
  %532 = vmatprep.subr.bf16.mxu0 0
  %533 = vmatpush1.bf16.msra.mxu0 0
  %534 = vmatprep.subr.bf16.mxu0 0
  %535 = vmatpush1.bf16.msra.mxu0 0
  %536 = vmatprep.subr.bf16.mxu0 0
  %537 = vmatpush1.bf16.msra.mxu0 0
  %538 = vmatprep.subr.bf16.mxu0 0
  %539 = vmatpush1.bf16.msra.mxu0 0
  %540 = vmatprep.subr.bf16.mxu0 0
  %541 = vmatpush1.bf16.msra.mxu0 0
  %542 = vmatprep.subr.bf16.mxu0 0
  %543 = vmatpush1.bf16.msra.mxu0 0
  %544 = vmatprep.subr.bf16.mxu0 0
  %545 = vmatpush1.bf16.msra.mxu0 0
  %546 = vmatprep.subr.bf16.mxu0 0
  %547 = vmatpush1.bf16.msra.mxu0 0
  %548 = vmatprep.subr.bf16.mxu0 0
  %549 = vmatpush1.bf16.msra.mxu0 0
  %550 = vmatprep.subr.bf16.mxu0 0
  %551 = vmatpush1.bf16.msra.mxu0 0
  %552 = vmatprep.mubr.bf16.mxu0 0
  %553 = vmatmul.mubr.bf16.gmra.mrb[0].mxu0 %v515
  %v554 = vpop.f32.mrb[0].mxu0
  %v555 = vadd.f32 %v502, %v554
  %v556 = vpop.f32.mrb[0].mxu0
  %v557 = vpop.f32.mrb[0].mxu0
  %v558 = vadd.f32 %v504, %v557
  %v559 = vpop.f32.mrb[0].mxu0
  %560 = vmatprep.mubr.bf16.mxu0 0
  %561 = vmatmul.mubr.bf16.gmra.mrb[0].mxu0 %v518
  %v562 = vpop.f32.mrb[0].mxu0
  %v563 = vadd.f32 %v506, %v562
  %v564 = vpop.f32.mrb[0].mxu0
  %v565 = vpop.f32.mrb[0].mxu0
  %v566 = vadd.f32 %v508, %v565
  %v567 = vpop.f32.mrb[0].mxu0
  %568 = vdwg.mxu0
  %570 = vset.pattern.permute.xlu0 0
  %571 = vperm.xlu0 %570, %v555
  %v572 = vpop.permute.xlu0 %571
  %575 = vset.pattern.permute.xlu0 0
  %576 = vperm.xlu0 %575, %v558
  %v577 = vpop.permute.xlu0 %576
  %580 = vset.pattern.permute.xlu0 0
  %581 = vperm.xlu0 %580, %v563
  %v582 = vpop.permute.xlu0 %581
  %585 = vset.pattern.permute.xlu0 0
  %586 = vperm.xlu0 %585, %v566
  %v587 = vpop.permute.xlu0 %586
  %v589 = vadd.f32 %v373, %v572
  %v590 = vadd.f32 %v377, %v577
  %v591 = vadd.f32 %v383, %v582
  %v592 = vadd.f32 %v387, %v587
  %v593 = vmax.f32 %v589, 0.0
  %v594 = vmax.f32 %v590, 0.0
  %v595 = vmax.f32 %v591, 0.0
  %v596 = vmax.f32 %v592, 0.0
  %597 = vmax.xlane.f32.xlu0 %v299
  %v598 = vpop.xlane.xlu0 %597
  %599 = vmax.xlane.f32.xlu0 %v301
  %v600 = vpop.xlane.xlu0 %599
  %601 = vmax.xlane.f32.xlu0 %v303
  %v602 = vpop.xlane.xlu0 %601
  %603 = vmax.xlane.f32.xlu0 %v305
  %v604 = vpop.xlane.xlu0 %603
  %605 = vmax.xlane.f32.xlu0 %v307
  %v606 = vpop.xlane.xlu0 %605
  %607 = vmax.xlane.f32.xlu0 %v309
  %v608 = vpop.xlane.xlu0 %607
  %609 = vmax.xlane.f32.xlu0 %v311
  %v610 = vpop.xlane.xlu0 %609
  %611 = vmax.xlane.f32.xlu0 %v313
  %v612 = vpop.xlane.xlu0 %611
  %v613 = vsub.f32 %v299, %v598
  %v614 = vsub.f32 %v301, %v600
  %v615 = vsub.f32 %v303, %v602
  %v616 = vsub.f32 %v305, %v604
  %v617 = vsub.f32 %v307, %v606
  %v618 = vsub.f32 %v309, %v608
  %v619 = vsub.f32 %v311, %v610
  %v620 = vsub.f32 %v313, %v612
  %v621 = vmul.f32 %v613, 1.442695
  %v622 = vpow.pop %v621
  %v623 = vmul.f32 %v614, 1.442695
  %v624 = vpow.pop %v623
  %v625 = vmul.f32 %v615, 1.442695
  %v626 = vpow.pop %v625
  %v627 = vmul.f32 %v616, 1.442695
  %v628 = vpow.pop %v627
  %v629 = vmul.f32 %v617, 1.442695
  %v630 = vpow.pop %v629
  %v631 = vmul.f32 %v618, 1.442695
  %v632 = vpow.pop %v631
  %v633 = vmul.f32 %v619, 1.442695
  %v634 = vpow.pop %v633
  %v635 = vmul.f32 %v620, 1.442695
  %v636 = vpow.pop %v635
  %v637 = vmul.f32 %v622, %v299
  %v638 = vmul.f32 %v624, %v301
  %v639 = vmul.f32 %v626, %v303
  %v640 = vmul.f32 %v628, %v305
  %v641 = vmul.f32 %v630, %v307
  %v642 = vmul.f32 %v632, %v309
  %v643 = vmul.f32 %v634, %v311
  %v644 = vmul.f32 %v636, %v313
  %645 = vadd.xlane.f32.xlu0 %v637
  %v646 = vpop.xlane.xlu0 %645
  %647 = vadd.xlane.f32.xlu0 %v638
  %v648 = vpop.xlane.xlu0 %647
  %649 = vadd.xlane.f32.xlu0 %v639
  %v650 = vpop.xlane.xlu0 %649
  %651 = vadd.xlane.f32.xlu0 %v640
  %v652 = vpop.xlane.xlu0 %651
  %653 = vadd.xlane.f32.xlu0 %v641
  %v654 = vpop.xlane.xlu0 %653
  %655 = vadd.xlane.f32.xlu0 %v642
  %v656 = vpop.xlane.xlu0 %655
  %657 = vadd.xlane.f32.xlu0 %v643
  %v658 = vpop.xlane.xlu0 %657
  %659 = vadd.xlane.f32.xlu0 %v644
  %v660 = vpop.xlane.xlu0 %659
  %661 = vadd.xlane.f32.xlu0 %v622
  %v662 = vpop.xlane.xlu0 %661
  %663 = vadd.xlane.f32.xlu0 %v624
  %v664 = vpop.xlane.xlu0 %663
  %665 = vadd.xlane.f32.xlu0 %v626
  %v666 = vpop.xlane.xlu0 %665
  %667 = vadd.xlane.f32.xlu0 %v628
  %v668 = vpop.xlane.xlu0 %667
  %669 = vadd.xlane.f32.xlu0 %v630
  %v670 = vpop.xlane.xlu0 %669
  %671 = vadd.xlane.f32.xlu0 %v632
  %v672 = vpop.xlane.xlu0 %671
  %673 = vadd.xlane.f32.xlu0 %v634
  %v674 = vpop.xlane.xlu0 %673
  %675 = vadd.xlane.f32.xlu0 %v636
  %v676 = vpop.xlane.xlu0 %675
  %v677 = vrcp.pop %v662
  %v678 = vmul.f32 %v646, %v677
  %v679 = vrcp.pop %v664
  %v680 = vmul.f32 %v648, %v679
  %v681 = vrcp.pop %v666
  %v682 = vmul.f32 %v650, %v681
  %v683 = vrcp.pop %v668
  %v684 = vmul.f32 %v652, %v683
  %v685 = vrcp.pop %v670
  %v686 = vmul.f32 %v654, %v685
  %v687 = vrcp.pop %v672
  %v688 = vmul.f32 %v656, %v687
  %v689 = vrcp.pop %v674
  %v690 = vmul.f32 %v658, %v689
  %v691 = vrcp.pop %v676
  %v692 = vmul.f32 %v660, %v691
  %v693 = vpack.c.bf16 %v680, %v678
  %v694 = vpack.c.bf16 %v684, %v682
  %v695 = vpack.c.bf16 %v688, %v686
  %v696 = vpack.c.bf16 %v692, %v690
  %697 = vmatprep.subr.bf16.mxu0 0
  %698 = vmatpush1.bf16.msra.mxu0 %v693
  %699 = vmatprep.subr.bf16.mxu0 0
  %700 = vmatpush1.bf16.msra.mxu0 %v694
  %701 = vmatprep.subr.bf16.mxu0 0
  %702 = vmatpush1.bf16.msra.mxu0 %v695
  %703 = vmatprep.subr.bf16.mxu0 0
  %704 = vmatpush1.bf16.msra.mxu0 %v696
  %705 = vmatprep.subr.bf16.mxu0 0
  %706 = vmatpush1.bf16.msra.mxu0 0
  %707 = vmatprep.subr.bf16.mxu0 0
  %708 = vmatpush1.bf16.msra.mxu0 0
  %709 = vmatprep.subr.bf16.mxu0 0
  %710 = vmatpush1.bf16.msra.mxu0 0
  %711 = vmatprep.subr.bf16.mxu0 0
  %712 = vmatpush1.bf16.msra.mxu0 0
  %713 = vmatprep.subr.bf16.mxu0 0
  %714 = vmatpush1.bf16.msra.mxu0 0
  %715 = vmatprep.subr.bf16.mxu0 0
  %716 = vmatpush1.bf16.msra.mxu0 0
  %717 = vmatprep.subr.bf16.mxu0 0
  %718 = vmatpush1.bf16.msra.mxu0 0
  %719 = vmatprep.subr.bf16.mxu0 0
  %720 = vmatpush1.bf16.msra.mxu0 0
  %721 = vmatprep.subr.bf16.mxu0 0
  %722 = vmatpush1.bf16.msra.mxu0 0
  %723 = vmatprep.subr.bf16.mxu0 0
  %724 = vmatpush1.bf16.msra.mxu0 0
  %725 = vmatprep.subr.bf16.mxu0 0
  %726 = vmatpush1.bf16.msra.mxu0 0
  %727 = vmatprep.subr.bf16.mxu0 0
  %728 = vmatpush1.bf16.msra.mxu0 0
  %729 = vmatprep.mubr.bf16.mxu0 0
  %730 = vmatmul.mubr.bf16.gmra.mrb[0].mxu0 %v515
  %v731 = vpop.f32.mrb[0].mxu0
  %v732 = vadd.f32 %v502, %v731
  %v733 = vpop.f32.mrb[0].mxu0
  %v734 = vpop.f32.mrb[0].mxu0
  %v735 = vadd.f32 %v504, %v734
  %v736 = vpop.f32.mrb[0].mxu0
  %737 = vmatprep.mubr.bf16.mxu0 0
  %738 = vmatmul.mubr.bf16.gmra.mrb[0].mxu0 %v518
  %v739 = vpop.f32.mrb[0].mxu0
  %v740 = vadd.f32 %v506, %v739
  %v741 = vpop.f32.mrb[0].mxu0
  %v742 = vpop.f32.mrb[0].mxu0
  %v743 = vadd.f32 %v508, %v742
  %v744 = vpop.f32.mrb[0].mxu0
  %745 = vdwg.mxu0
  %747 = vset.pattern.permute.xlu0 0
  %748 = vperm.xlu0 %747, %v732
  %v749 = vpop.permute.xlu0 %748
  %752 = vset.pattern.permute.xlu0 0
  %753 = vperm.xlu0 %752, %v735
  %v754 = vpop.permute.xlu0 %753
  %757 = vset.pattern.permute.xlu0 0
  %758 = vperm.xlu0 %757, %v740
  %v759 = vpop.permute.xlu0 %758
  %762 = vset.pattern.permute.xlu0 0
  %763 = vperm.xlu0 %762, %v743
  %v764 = vpop.permute.xlu0 %763
  %v766 = vadd.f32 %v375, %v749
  %v767 = vadd.f32 %v379, %v754
  %v768 = vadd.f32 %v385, %v759
  %v769 = vadd.f32 %v389, %v764
  %v770 = vmax.f32 %v766, 0.0
  %v771 = vmax.f32 %v767, 0.0
  %v772 = vmax.f32 %v768, 0.0
  %v773 = vmax.f32 %v769, 0.0
  %v774 = vpack.c.bf16 %v594, %v593
  %v775 = vpack.c.bf16 %v771, %v770
  %v776 = vpack.c.bf16 %v596, %v595
  %v777 = vpack.c.bf16 %v773, %v772
  %v778 = vld [vmem:[%s1 + $0x50] sm:$0x3]
  %v779 = vld [vmem:[%s2] sm:$0x7]
  %781 = vset.pattern.permute.xlu0 3
  %782 = vperm.xlu0 %781, %v779
  %v783 = vpop.permute.xlu0 %782
  %v786 = vsel %vm212, %v778, 0
  %788 = vmatprep.subr.bf16.mxu0 %v775
  %789 = vmatpush1.bf16.msra.mxu0 %v774
  %790 = vmatprep.subr.bf16.mxu0 %v777
  %791 = vmatpush1.bf16.msra.mxu0 %v776
  %792 = vmatprep.subr.bf16.mxu0 0
  %793 = vmatpush1.bf16.msra.mxu0 0
  %794 = vmatprep.subr.bf16.mxu0 0
  %795 = vmatpush1.bf16.msra.mxu0 0
  %796 = vmatprep.subr.bf16.mxu0 0
  %797 = vmatpush1.bf16.msra.mxu0 0
  %798 = vmatprep.subr.bf16.mxu0 0
  %799 = vmatpush1.bf16.msra.mxu0 0
  %800 = vmatprep.subr.bf16.mxu0 0
  %801 = vmatpush1.bf16.msra.mxu0 0
  %802 = vmatprep.subr.bf16.mxu0 0
  %803 = vmatpush1.bf16.msra.mxu0 0
  %804 = vmatprep.subr.bf16.mxu0 0
  %805 = vmatpush1.bf16.msra.mxu0 0
  %806 = vmatprep.subr.bf16.mxu0 0
  %807 = vmatpush1.bf16.msra.mxu0 0
  %808 = vmatprep.subr.bf16.mxu0 0
  %809 = vmatpush1.bf16.msra.mxu0 0
  %810 = vmatprep.subr.bf16.mxu0 0
  %811 = vmatpush1.bf16.msra.mxu0 0
  %812 = vmatprep.subr.bf16.mxu0 0
  %813 = vmatpush1.bf16.msra.mxu0 0
  %814 = vmatprep.subr.bf16.mxu0 0
  %815 = vmatpush1.bf16.msra.mxu0 0
  %816 = vmatprep.subr.bf16.mxu0 0
  %817 = vmatpush1.bf16.msra.mxu0 0
  %818 = vmatprep.subr.bf16.mxu0 0
  %819 = vmatpush1.bf16.msra.mxu0 0
  %820 = vmatprep.mubr.bf16.mxu0 0
  %821 = vmatmul.mubr.bf16.gmra.mrb[0].mxu0 %v786
  %v822 = vpop.f32.mrb[0].mxu0
  %v823 = vadd.f32 %v783, %v822
  %v824 = vpop.f32.mrb[0].mxu0
  %v825 = vadd.f32 %v783, %v824
  %v826 = vpop.f32.mrb[0].mxu0
  %v827 = vpop.f32.mrb[0].mxu0
  %828 = vdwg.mxu0
  %v829 = vtanh.pop %v823
  %v830 = vtanh.pop %v825
  %v833 = vcombine.low %v829, %v830
  %835 = vst [vmem:[%s3] sm:$0x77] %v833
  // Predicated region
  $region14: #{res_sizes_forward.1} parent=0 // pred_check
    _
  $region15: #{res_sizes_forward.1} parent=0 // pred_check_branch
    %837 = sbr.rel (0) target = $region17
  $region16: #{res_sizes_forward.1} parent=0 // pred_region
    _
  $region17: #{res_sizes_forward.1} parent=0 // pred_fallthru
    _
  // Predicated region
  $region18: #{res_sizes_forward.1} parent=0 // pred_check
    _
  $region19: #{res_sizes_forward.1} parent=0 // pred_check_branch
    %839 = sbr.rel (0) target = $region21
  $region20: #{res_sizes_forward.1} parent=0 // pred_region
    _
  $region21: #{res_sizes_forward.1} parent=0 // pred_fallthru
    _

</llo_original>
